<compile_context>
chip_gen: v6e
topology: v6e:2x2x1
jax: 0.10.0
libtpu: 0.0.40
codegen_flags: <defaults>
</compile_context>

<pallas_src>
import functools
import math

import jax
import jax.numpy as jnp
import numpy as np
from jax import lax
from jax.experimental import pallas as pl
from jax.experimental.pallas import tpu as pltpu

_NEG = -1e30  # finite "minus infinity" for f32 masking
_VMEM_LIMIT = 64 * 1024 * 1024


# ---------------------------------------------------------------------------
# helpers
# ---------------------------------------------------------------------------
def _pick_tile(dim, target, align):
    """Largest tile <= target that divides `dim` and is a multiple of `align`;
    falls back to the full dim (always legal: block == full array dim)."""
    if dim <= target:
        return dim
    t = (target // align) * align
    while t >= align:
        if dim % t == 0:
            return t
        t -= align
    return dim


def _heads_per_block(nh, hn):
    """Smallest head-group size so the q/k/v/out last-dim block is lane aligned
    (hb*hn % 128 == 0); falls back to all heads (block == full hidden dim)."""
    for hb in range(1, nh + 1):
        if nh % hb == 0 and (hb * hn) % 128 == 0:
            return hb
    return nh


# ---------------------------------------------------------------------------
# Tiled, grouped linear:  out[g] = x @ w[g] + b[g]
# ---------------------------------------------------------------------------
def _linear_kernel(x_ref, w_ref, b_ref, o_ref, acc_ref):
    k = pl.program_id(3)

    @pl.when(k == 0)
    def _():
        acc_ref[...] = jnp.zeros_like(acc_ref)

    # bf16 operands straight into the MXU, f32 accumulation.
    acc_ref[...] += jnp.dot(x_ref[...], w_ref[...], preferred_element_type=jnp.float32)

    @pl.when(k == pl.num_programs(3) - 1)
    def _():
        o_ref[...] = (acc_ref[...] + b_ref[...].astype(jnp.float32)).astype(o_ref.dtype)


def grouped_linear(x, w_g, b_g, *, tm=512, tn=512, tk=512):
    """x: [M, K], w_g: [G, K, N], b_g: [G, 1, N] -> [G, M, N] (same dtype as x)."""
    M, K = x.shape
    G, _, N = w_g.shape
    tm = _pick_tile(M, tm, 16)     # bf16 sublane packing
    tn = _pick_tile(N, tn, 128)
    tk = _pick_tile(K, tk, 128)
    grid = (G, M // tm, N // tn, K // tk)
    return pl.pallas_call(
        _linear_kernel,
        out_shape=jax.ShapeDtypeStruct((G, M, N), x.dtype),
        grid=grid,
        in_specs=[
            pl.BlockSpec((tm, tk), lambda g, i, j, k: (i, k)),
            pl.BlockSpec((None, tk, tn), lambda g, i, j, k: (g, k, j)),
            pl.BlockSpec((None, 1, tn), lambda g, i, j, k: (g, 0, j)),
        ],
        out_specs=pl.BlockSpec((None, tm, tn), lambda g, i, j, k: (g, i, j)),
        scratch_shapes=[pltpu.VMEM((tm, tn), jnp.float32)],
        compiler_params=pltpu.CompilerParams(
            dimension_semantics=("parallel", "parallel", "parallel", "arbitrary"),
            vmem_limit_bytes=_VMEM_LIMIT,
        ),
    )(x, w_g, b_g)


# ---------------------------------------------------------------------------
# GLM-masked flash attention (online softmax, KV-axis tiled, head-blocked grid)
# ---------------------------------------------------------------------------
def _glm_attn_kernel(glm_ref, q_ref, k_ref, v_ref, o_ref, m_sc, l_sc, acc_sc,
                     *, hb, hn, tq, tk):
    bi = pl.program_id(0)
    qi = pl.program_id(2)
    ki = pl.program_id(3)
    nk = pl.num_programs(3)

    @pl.when(ki == 0)
    def _():
        m_sc[...] = jnp.full_like(m_sc, _NEG)
        l_sc[...] = jnp.zeros_like(l_sc)
        acc_sc[...] = jnp.zeros_like(acc_sc)

    brk = glm_ref[bi]                 # prefix break point for this batch
    q_start = qi * tq
    kv_start = ki * tk
    q_end = q_start + (tq - 1)
    kv_end = kv_start + (tk - 1)

    # live: tile contributes; full: every (row, col) in the tile is allowed.
    live = jnp.logical_or(kv_start <= q_end, kv_start < brk)
    full = jnp.logical_or(kv_end <= q_start, kv_end < brk)

    def attend(allowed):
        for h_idx in range(hb):
            lo = h_idx * hn
            qh = q_ref[:, lo:lo + hn]                   # [tq, hn] bf16 (scale pre-folded)
            kh = k_ref[:, lo:lo + hn]                   # [tk, hn]
            vh = v_ref[:, lo:lo + hn]                   # [tk, hn]

            s = lax.dot_general(qh, kh, (((1,), (1,)), ((), ())),
                                preferred_element_type=jnp.float32)   # [tq, tk] f32
            if allowed is not None:
                s = jnp.where(allowed, s, _NEG)

            m_prev = m_sc[h_idx]                        # [tq, 1]
            m_new = jnp.maximum(m_prev, jnp.max(s, axis=-1, keepdims=True))
            p = jnp.exp(s - m_new)                      # [tq, tk] f32
            if allowed is not None:
                # rows fully masked within this tile contribute exactly nothing
                p = jnp.where(allowed, p, 0.0)
            alpha = jnp.exp(m_prev - m_new)

            l_sc[h_idx] = alpha * l_sc[h_idx] + jnp.sum(p, axis=-1, keepdims=True)
            acc_sc[h_idx] = alpha * acc_sc[h_idx] + jnp.dot(
                p.astype(vh.dtype), vh, preferred_element_type=jnp.float32)
            m_sc[h_idx] = m_new

    @pl.when(jnp.logical_and(live, full))
    def _():
        attend(None)                                    # fast path: no mask work

    @pl.when(jnp.logical_and(live, jnp.logical_not(full)))
    def _():
        row = q_start + lax.broadcasted_iota(jnp.int32, (tq, tk), 0)
        col = kv_start + lax.broadcasted_iota(jnp.int32, (tq, tk), 1)
        allowed = jnp.logical_or(col <= row, col < brk)  # causal OR inside prefix
        attend(allowed)

    @pl.when(ki == nk - 1)
    def _():
        for h_idx in range(hb):
            lo = h_idx * hn
            inv = pl.reciprocal(l_sc[h_idx], approx=True)   # EUP slot
            o_ref[:, lo:lo + hn] = (acc_sc[h_idx] * inv).astype(o_ref.dtype)


def glm_flash_attention(qkv, glm_mask, *, num_heads, tq=512, tkv=256):
    """qkv: [3, b, s, h] stacked q/k/v (scale folded into q); glm_mask: int32 [b]
    -> context [b, s, h]."""
    _, b, s, h = qkv.shape
    nh = num_heads
    hn = h // nh
    hb = _heads_per_block(nh, hn)       # heads per grid step (lane aligned block)
    hbn = hb * hn
    n_hb = nh // hb
    tq = _pick_tile(s, tq, 16)
    tkv = _pick_tile(s, tkv, 16)

    kernel = functools.partial(_glm_attn_kernel, hb=hb, hn=hn, tq=tq, tk=tkv)

    def _last_live(bi, qi, glm):
        brk = glm[bi]
        last_causal = (qi * tq + (tq - 1)) // tkv
        last_prefix = (brk + (tkv - 1)) // tkv - 1
        return jnp.maximum(last_causal, last_prefix)

    def q_map(bi, hi, qi, ki, glm):
        return (0, bi, qi, hi)

    def k_map(bi, hi, qi, ki, glm):
        # clamp dead KV tiles to the last live block -> pipeline skips the DMA
        return (1, bi, jnp.minimum(ki, _last_live(bi, qi, glm)), hi)

    def v_map(bi, hi, qi, ki, glm):
        return (2, bi, jnp.minimum(ki, _last_live(bi, qi, glm)), hi)

    def o_map(bi, hi, qi, ki, glm):
        return (bi, qi, hi)

    return pl.pallas_call(
        kernel,
        out_shape=jax.ShapeDtypeStruct((b, s, h), qkv.dtype),
        grid_spec=pltpu.PrefetchScalarGridSpec(
            num_scalar_prefetch=1,
            grid=(b, n_hb, s // tq, s // tkv),
            in_specs=[
                pl.BlockSpec((None, None, tq, hbn), q_map),
                pl.BlockSpec((None, None, tkv, hbn), k_map),
                pl.BlockSpec((None, None, tkv, hbn), v_map),
            ],
            out_specs=pl.BlockSpec((None, tq, hbn), o_map),
            scratch_shapes=[
                pltpu.VMEM((hb, tq, 1), jnp.float32),    # running max  m
                pltpu.VMEM((hb, tq, 1), jnp.float32),    # running sum  l
                pltpu.VMEM((hb, tq, hn), jnp.float32),   # f32 accumulator
            ],
        ),
        compiler_params=pltpu.CompilerParams(
            dimension_semantics=("parallel", "parallel", "parallel", "arbitrary"),
            vmem_limit_bytes=_VMEM_LIMIT,
        ),
    )(glm_mask, qkv, qkv, qkv)


# ---------------------------------------------------------------------------
# One-time parameter prep (hoisted out of the hot path)
# ---------------------------------------------------------------------------
def prepare_params(params):
    """Re-layout w_qkv to [3, h, h] / b_qkv to [3, 1, h] and fold the FA default
    softmax scale 1/sqrt(head_dim) into the Q projection. Done once per model."""
    h = params["w_dense"].shape[0]
    nh = params["num_heads"]
    hn = h // nh
    scale = 1.0 / math.sqrt(hn)

    w_qkv = params["w_qkv"].reshape(h, 3, h).transpose(1, 0, 2)    # [3, h, h]
    b_qkv = params["b_qkv"].reshape(3, 1, h)                       # [3, 1, h]
    s_vec = jnp.array([scale, 1.0, 1.0], jnp.float32).reshape(3, 1, 1)
    w_qkv = (w_qkv.astype(jnp.float32) * s_vec).astype(params["w_qkv"].dtype)
    b_qkv = (b_qkv.astype(jnp.float32) * s_vec).astype(params["b_qkv"].dtype)

    return {
        "num_heads": nh,
        "w_qkv_g": w_qkv,
        "b_qkv_g": b_qkv,
        "w_dense_g": params["w_dense"].reshape(1, h, h),
        "b_dense_g": params["b_dense"].reshape(1, 1, h),
    }


# ---------------------------------------------------------------------------
# Module forward (glue in plain JAX, hot paths in Pallas)
# ---------------------------------------------------------------------------
def hf_glm_self_attention_fa(hidden_states, ltor_mask, prepared):
    b, s, h = hidden_states.shape
    nh = prepared["num_heads"]

    # query_key_value projection, emitted as stacked [3, b*s, h] so attention can
    # select q/k/v purely via BlockSpec index maps (no HBM transposes afterwards).
    x2d = hidden_states.reshape(b * s, h)
    qkv = grouped_linear(x2d, prepared["w_qkv_g"], prepared["b_qkv_g"])   # [3, b*s, h]
    qkv = qkv.reshape(3, b, s, h)

    # FA2 glue: glm break point = first blocked column of row 0 of the mask.
    # argmin(ltor_mask row) == argmin(-65504*(1-ltor_mask) row); a fully-allowed row
    # yields 0 (pure causal), matching the FA2 path of the module.
    glm_mask = jnp.argmin(ltor_mask[:, 0, 0, :], axis=-1).astype(jnp.int32)   # [b]

    ctx = glm_flash_attention(qkv, glm_mask, num_heads=nh)                # [b, s, h]

    # dense projection; attention/output dropouts are identity in eval mode
    out = grouped_linear(ctx.reshape(b * s, h),
                         prepared["w_dense_g"], prepared["b_dense_g"])    # [1, b*s, h]
    return out.reshape(b, s, h)


# ---------------------------------------------------------------------------
# Pure-JAX reference (for correctness check)
# ---------------------------------------------------------------------------
def reference_forward(hidden_states, ltor_mask, params):
    b, s, h = hidden_states.shape
    nh = params["num_heads"]
    hn = h // nh
    f32 = jnp.float32

    x = hidden_states.astype(f32).reshape(b * s, h)
    qkv = x @ params["w_qkv"].astype(f32) + params["b_qkv"].astype(f32)
    qkv = qkv.astype(hidden_states.dtype).astype(f32)   # bf16 round-trip between stages
    qkv = qkv.reshape(b, s, 3, nh, hn)
    q = qkv[:, :, 0].transpose(0, 2, 1, 3)
    k = qkv[:, :, 1].transpose(0, 2, 1, 3)
    v = qkv[:, :, 2].transpose(0, 2, 1, 3)

    brk = jnp.argmin(ltor_mask[:, 0, 0, :], axis=-1).astype(jnp.int32)

    scale = 1.0 / math.sqrt(hn)
    scores = jnp.einsum("bnqd,bnkd->bnqk", q, k) * scale
    i = jnp.arange(s)[:, None]
    j = jnp.arange(s)[None, :]
    allowed = (j <= i)[None, None, :, :] | (
        jnp.arange(s)[None, None, None, :] < brk[:, None, None, None]
    )
    scores = jnp.where(allowed, scores, _NEG)
    p = jax.nn.softmax(scores, axis=-1)
    ctx = jnp.einsum("bnqk,bnkd->bnqd", p, v)
    ctx = ctx.astype(hidden_states.dtype).astype(f32)
    ctx = ctx.transpose(0, 2, 1, 3).reshape(b * s, h)
    out = ctx @ params["w_dense"].astype(f32) + params["b_dense"].astype(f32)
    return out.reshape(b, s, h)


# ---------------------------------------------------------------------------
if __name__ == "__main__":
    key = jax.random.PRNGKey(0)
    b, s, h, nh = 2, 8, 32, 4
    dtype = jnp.bfloat16  # module's FA path expects half precision

    k1, k2, k3, k4, k5 = jax.random.split(key, 5)
    bound = 1.0 / math.sqrt(h)
    # nn.Linear(h, 3h): torch weight [3h, h] -> stored here pre-transposed as [h, 3h]
    params = {
        "num_heads": nh,
        "w_qkv": jax.random.uniform(k1, (h, 3 * h), jnp.float32, -bound, bound).astype(dtype),
        "b_qkv": jax.random.uniform(k2, (1, 3 * h), jnp.float32, -bound, bound).astype(dtype),
        "w_dense": jax.random.uniform(k3, (h, h), jnp.float32, -bound, bound).astype(dtype),
        "b_dense": jax.random.uniform(k4, (1, h), jnp.float32, -bound, bound).astype(dtype),
    }

    hidden_states = jax.random.normal(k5, (b, s, h), jnp.float32).astype(dtype)

    # GLM prefix-LM ltor_mask [b, 1, s, s]: 1 if (j <= i) or (j < break[b]) else 0
    breaks = jnp.array([3, 5], dtype=jnp.int32)
    ii = jnp.arange(s)[:, None]
    jj = jnp.arange(s)[None, :]
    causal = (jj <= ii)                                   # [s, s]
    prefix = jnp.arange(s)[None, :] < breaks[:, None]     # [b, s]
    ltor_mask = (causal[None, :, :] | prefix[:, None, :])[:, None, :, :].astype(jnp.float32)

    prepared = prepare_params(params)                     # one-time weight re-layout
    out = hf_glm_self_attention_fa(hidden_states, ltor_mask, prepared)
    out = jax.block_until_ready(out)

    ref = reference_forward(hidden_states, ltor_mask, params)
    np.testing.assert_allclose(
        np.asarray(out, dtype=np.float32), np.asarray(ref, dtype=np.float32),
        atol=5e-2, rtol=5e-2,
    )
    print("KERNEL_OK")
</pallas_src>

<mosaic_0001>
module attributes {stable_mosaic.version = 11 : i64} {
  func.func @_linear_kernel(%arg0: i32, %arg1: i32, %arg2: i32, %arg3: i32, %arg4: memref<16x32xbf16, #tpu.memory_space<vmem>>, %arg5: memref<1x32x32xbf16, #tpu.memory_space<vmem>>, %arg6: memref<1x1x32xbf16, #tpu.memory_space<vmem>>, %arg7: memref<1x16x32xbf16, #tpu.memory_space<vmem>>, %arg8: memref<16x32xf32, #tpu.memory_space<vmem>>) attributes {dimension_semantics = [#tpu.dimension_semantics<parallel>, #tpu.dimension_semantics<parallel>, #tpu.dimension_semantics<parallel>, #tpu.dimension_semantics<arbitrary>], iteration_bounds = array<i64: 3, 1, 1, 1>, scalar_prefetch = 0 : i64, scratch_operands = 1 : i64, tpu.core_type = #tpu.core_type<tc>, window_params = [{transform_indices = @transform_0, window_bounds = array<i64: 16, 32>}, {transform_indices = @transform_1, window_bounds = array<i64: 1, 32, 32>}, {transform_indices = @transform_2, window_bounds = array<i64: 1, 1, 32>}, {transform_indices = @transform_3, window_bounds = array<i64: 1, 16, 32>}]} {
    %c0_i32 = arith.constant 0 : i32
    %0 = arith.cmpi eq, %arg3, %c0_i32 : i32
    %1 = arith.extui %0 : i1 to i32
    %c0_i32_0 = arith.constant 0 : i32
    %2 = arith.cmpi ne, %1, %c0_i32_0 : i32
    scf.if %2 {
      %cst_11 = arith.constant 0.000000e+00 : f32
      %13 = vector.broadcast %cst_11 : f32 to vector<16x32xf32>
      %c0_12 = arith.constant 0 : index
      %c0_13 = arith.constant 0 : index
      %14 = vector.load %arg8[%c0_12, %c0_13] : memref<16x32xf32, #tpu.memory_space<vmem>>, vector<16x32xf32>
      tpu.vector_store %arg8[%c0_12, %c0_13], %13 {strides = array<i32>} : memref<16x32xf32, #tpu.memory_space<vmem>>, vector<16x32xf32>,
    } else {
    }
    %c0 = arith.constant 0 : index
    %c0_1 = arith.constant 0 : index
    %3 = vector.load %arg8[%c0, %c0_1] : memref<16x32xf32, #tpu.memory_space<vmem>>, vector<16x32xf32>
    %c0_2 = arith.constant 0 : index
    %c0_3 = arith.constant 0 : index
    %4 = vector.load %arg4[%c0_2, %c0_3] : memref<16x32xbf16, #tpu.memory_space<vmem>>, vector<16x32xbf16>
    %c0_4 = arith.constant 0 : index
    %c0_5 = arith.constant 0 : index
    %c0_6 = arith.constant 0 : index
    %5 = vector.load %arg5[%c0_4, %c0_5, %c0_6] : memref<1x32x32xbf16, #tpu.memory_space<vmem>>, vector<1x32x32xbf16>
    %6 = vector.shape_cast %5 : vector<1x32x32xbf16> to vector<32x32xbf16>
    %cst = arith.constant dense<0.000000e+00> : vector<16x32xf32>
    %7 = tpu.matmul %4, %6, %cst {dimension_numbers = #tpu.dot_dimension_numbers<[1], [0], [0], [1], [0, 0, 1, 1], [], []>} : vector<16x32xbf16>, vector<32x32xbf16>, vector<16x32xf32> -> vector<16x32xf32>
    %8 = arith.addf %3, %7 : vector<16x32xf32>
    %c0_7 = arith.constant 0 : index
    %c0_8 = arith.constant 0 : index
    %9 = vector.load %arg8[%c0_7, %c0_8] : memref<16x32xf32, #tpu.memory_space<vmem>>, vector<16x32xf32>
    tpu.vector_store %arg8[%c0_7, %c0_8], %8 {strides = array<i32>} : memref<16x32xf32, #tpu.memory_space<vmem>>, vector<16x32xf32>,
    %c0_i32_9 = arith.constant 0 : i32
    %10 = arith.cmpi eq, %arg3, %c0_i32_9 : i32
    %11 = arith.extui %10 : i1 to i32
    %c0_i32_10 = arith.constant 0 : i32
    %12 = arith.cmpi ne, %11, %c0_i32_10 : i32
    scf.if %12 {
      %c0_11 = arith.constant 0 : index
      %c0_12 = arith.constant 0 : index
      %13 = vector.load %arg8[%c0_11, %c0_12] : memref<16x32xf32, #tpu.memory_space<vmem>>, vector<16x32xf32>
      %c0_13 = arith.constant 0 : index
      %c0_14 = arith.constant 0 : index
      %c0_15 = arith.constant 0 : index
      %14 = vector.load %arg6[%c0_13, %c0_14, %c0_15] : memref<1x1x32xbf16, #tpu.memory_space<vmem>>, vector<1x1x32xbf16>
      %15 = vector.shape_cast %14 : vector<1x1x32xbf16> to vector<1x32xbf16>
      %16 = arith.extf %15 : vector<1x32xbf16> to vector<1x32xf32>
      %17 = vector.broadcast %16 : vector<1x32xf32> to vector<16x32xf32>
      %18 = arith.addf %13, %17 : vector<16x32xf32>
      %19 = arith.truncf %18 : vector<16x32xf32> to vector<16x32xbf16>
      %c0_16 = arith.constant 0 : index
      %c0_17 = arith.constant 0 : index
      %c0_18 = arith.constant 0 : index
      %20 = vector.load %arg7[%c0_16, %c0_17, %c0_18] : memref<1x16x32xbf16, #tpu.memory_space<vmem>>, vector<1x16x32xbf16>
      %21 = vector.shape_cast %20 : vector<1x16x32xbf16> to vector<16x32xbf16>
      %22 = vector.shape_cast %19 : vector<16x32xbf16> to vector<1x16x32xbf16>
      tpu.vector_store %arg7[%c0_16, %c0_17, %c0_18], %22 {strides = array<i32>} : memref<1x16x32xbf16, #tpu.memory_space<vmem>>, vector<1x16x32xbf16>,
    } else {
    }
    return
  }
  func.func @transform_0(%arg0: i32, %arg1: i32, %arg2: i32, %arg3: i32) -> (i32, i32) {
    %c0_i32 = arith.constant 0 : i32
    return %arg1, %arg3 : i32, i32
  }
  func.func @transform_1(%arg0: i32, %arg1: i32, %arg2: i32, %arg3: i32) -> (i32, i32, i32) {
    %c0_i32 = arith.constant 0 : i32
    return %arg0, %arg3, %arg2 : i32, i32, i32
  }
  func.func @transform_2(%arg0: i32, %arg1: i32, %arg2: i32, %arg3: i32) -> (i32, i32, i32) {
    %c0_i32 = arith.constant 0 : i32
    %c0_i32_0 = arith.constant 0 : i32
    return %arg0, %c0_i32, %arg2 : i32, i32, i32
  }
  func.func @transform_3(%arg0: i32, %arg1: i32, %arg2: i32, %arg3: i32) -> (i32, i32, i32) {
    %c0_i32 = arith.constant 0 : i32
    return %arg0, %arg1, %arg2 : i32, i32, i32
  }
}

</mosaic_0001>

<llo_original>
// kernel: tpu_custom_call.1
$region0: #{tpu_custom_call.1}
  #allocation0 [shape = 'u32[]', space=smem, size = 0x4, offset = 0x4, fixed_abs, tag = 'smem constant byte address 0x4 - core index']
  #allocation1 [shape = 'u32[144,128]{1,0:T(1,128)}', space=vmem, size = 0x12000, scoped, tag = 'internal scratch']
  #allocation2 [shape = 'f32[16,32]{1,0:T(8,128)}', space=vmem, size = 0x2000, scoped, tag = 'scratch operand']
  %s0 = inlined_call_operand.hbm [shape: bf16[16,32], index: 0, kind: input, shape index: {}]
  %s1 = inlined_call_operand.hbm [shape: bf16[3,32,32], index: 1, kind: input, shape index: {}]
  %s2 = inlined_call_operand.vmem [shape: bf16[3,1,32], index: 2, kind: input, shape index: {}]
  %s3 = inlined_call_operand.hbm [shape: bf16[3,16,32], index: 3, kind: output, shape index: {}]
  %s4 = sld [smem:[#allocation0]]
  $region61: #{tpu_custom_call.1} parent=0
    _
  %s6 = ssub.s32 1, %s4
  %s7 = scalar_select 0, %s6, %s4
  $region1: #{tpu_custom_call.1} parent=0
    #allocation3 [shape = 'u8[4096]{0}', space=vmem, size = 0x1000, scoped, tag = 'input window, operand 0, single buffered']
    #allocation4 [shape = 's32[2]{0}', space=sflag, size = 0x8, scoped, tag = 'scoped memory for tpu_custom_call.1']
    #allocation5 [shape = 's32[2]{0}', space=sflag, size = 0x8, scoped, tag = 'scoped memory for tpu_custom_call.1']
    #allocation6 [shape = 'u8[16384]{0}', space=vmem, size = 0x4000, scoped, tag = 'input window, operand 1']
    #allocation7 [shape = 's32[2]{0}', space=sflag, size = 0x8, scoped, tag = 'scoped memory for tpu_custom_call.1']
    #allocation8 [shape = 'u8[8192]{0}', space=vmem, size = 0x2000, scoped, tag = 'output window, operand 0']
    %8 = vsyncpa [#allocation4], 0
    %9 = vsyncpa [#allocation7], 0
    %s10 = scalar_lea.sflag [#allocation7], 1
    %11 = vsyncpa %s10, 0
    %12 = vsyncpa [#allocation5], 0
    %s13 = scalar_lea.sflag [#allocation5], 1
    %14 = vsyncpa %s13, 0
    loop: start=0, step=1, limit=5
    $region2: #{tpu_custom_call.1} parent=1 // loop_pre_header
      _
    $region3: #{tpu_custom_call.1} parent=1 // loop_header
      %s16 = sphi 0, %s20
      %p17 = scmp.ge.s32.totalorder %s16, 5
      %s23 = sphi 0, %s49
      %s24 = sphi 0, %s45
      %s25 = sphi 0, %s41
      %s26 = sphi 0, %s37
      %s27 = sphi 0, %s23
      %s28 = sphi 0, %s24
      %s29 = sphi 0, %s25
      %s30 = sphi 0, %s26
      %s31 = sphi 0, %s27
      %s32 = sphi 0, %s28
      %s33 = sphi 0, %s29
      %s34 = sphi 0, %s30
      %s54 = sphi 0, %s56
      %s57 = sphi 0, %s54
      %s58 = sphi 0, %s57
      %s74 = sphi 0, %s58
      %s84 = sphi 0, %s86
      %s87 = sphi 0, %s84
      %s88 = sphi 0, %s87
      %s104 = sphi 0, %s88
      %s112 = sphi 0, %s114
      %s115 = sphi 0, %s112
      %s116 = sphi 0, %s115
      %s132 = sphi 0, %s116
      %s142 = sphi 0, %s144
      %s145 = sphi 0, %s142
      %s146 = sphi 0, %s145
      %s162 = sphi 0, %s146
    $region4: #{tpu_custom_call.1} parent=1 // loop_header_branch
      %19 = sbr.rel (%p17) target = $region8
    $region5: #{tpu_custom_call.1} parent=1 // loop_body
      %s21 = ssub.s32 %s16, 1
      %s22 = ssub.s32 %s16, 2
      %s35 = sadd.s32 1, %s26
      %p36 = scmp.ge.s32.totalorder %s35, 1
      %s37 = scalar_select %p36, 0, %s35
      %s38 = sadd.s32 1, %s25
      %s39 = scalar_select %p36, %s38, %s25
      %p40 = scmp.ge.s32.totalorder %s39, 1
      %s41 = scalar_select %p40, 0, %s39
      %s42 = sadd.s32 1, %s24
      %s43 = scalar_select %p40, %s42, %s24
      %p44 = scmp.ge.s32.totalorder %s43, 1
      %s45 = scalar_select %p44, 0, %s43
      %s46 = sadd.s32 1, %s23
      %s47 = scalar_select %p44, %s46, %s23
      %p48 = scmp.ge.s32.totalorder %s47, 3
      %s49 = scalar_select %p48, 0, %s47
      %s50 = ssub.s32 %s24, %s45
      %s51 = ssub.s32 %s26, %s37
      %s52 = sor.u32 %s50, %s51
      %p53 = scmp.eq.s32.totalorder %s52, 0
      %s55 = sadd.s32 %s54, 1
      %s56 = scalar_select %p53, %s54, %s55
      %p59 = pneg %p53
      %p60 = scmp.eq.s32.totalorder %s16, 2
      %p61 = por %p59, %p60
      %p62 = scmp.ne.s32.totalorder %s54, %s57
      %p63 = scmp.eq.s32.totalorder %s16, 0
      %p64 = por %p62, %p63
      %p65 = scmp.ne.s32.totalorder %s54, %s57
      %p66 = scmp.eq.s32.totalorder %s21, 2
      %p67 = por %p65, %p66
      %p68 = scmp.ne.s32.totalorder %s57, %s58
      %p69 = scmp.eq.s32.totalorder %s21, 0
      %p70 = por %p68, %p69
      %p71 = scmp.ne.s32.totalorder %s57, %s58
      %p72 = scmp.eq.s32.totalorder %s22, 2
      %p73 = por %p71, %p72
      %p75 = scmp.ne.s32.totalorder %s58, %s74
      %p76 = scmp.eq.s32.totalorder %s22, 0
      %p77 = por %p75, %p76
      %s78 = ssub.s32 %s23, %s49
      %s79 = ssub.s32 %s26, %s37
      %s80 = sor.u32 %s78, %s79
      %s81 = ssub.s32 %s25, %s41
      %s82 = sor.u32 %s80, %s81
      %p83 = scmp.eq.s32.totalorder %s82, 0
      %s85 = sadd.s32 %s84, 1
      %s86 = scalar_select %p83, %s84, %s85
      %p89 = pneg %p83
      %p90 = scmp.eq.s32.totalorder %s16, 2
      %p91 = por %p89, %p90
      %p92 = scmp.ne.s32.totalorder %s84, %s87
      %p93 = scmp.eq.s32.totalorder %s16, 0
      %p94 = por %p92, %p93
      %p95 = scmp.ne.s32.totalorder %s84, %s87
      %p96 = scmp.eq.s32.totalorder %s21, 2
      %p97 = por %p95, %p96
      %p98 = scmp.ne.s32.totalorder %s87, %s88
      %p99 = scmp.eq.s32.totalorder %s21, 0
      %p100 = por %p98, %p99
      %p101 = scmp.ne.s32.totalorder %s87, %s88
      %p102 = scmp.eq.s32.totalorder %s22, 2
      %p103 = por %p101, %p102
      %p105 = scmp.ne.s32.totalorder %s88, %s104
      %p106 = scmp.eq.s32.totalorder %s22, 0
      %p107 = por %p105, %p106
      %s108 = ssub.s32 %s23, %s49
      %s109 = ssub.s32 %s25, %s41
      %s110 = sor.u32 %s108, %s109
      %p111 = scmp.eq.s32.totalorder %s110, 0
      %s113 = sadd.s32 %s112, 1
      %s114 = scalar_select %p111, %s112, %s113
      %p117 = pneg %p111
      %p118 = scmp.eq.s32.totalorder %s16, 2
      %p119 = por %p117, %p118
      %p120 = scmp.ne.s32.totalorder %s112, %s115
      %p121 = scmp.eq.s32.totalorder %s16, 0
      %p122 = por %p120, %p121
      %p123 = scmp.ne.s32.totalorder %s112, %s115
      %p124 = scmp.eq.s32.totalorder %s21, 2
      %p125 = por %p123, %p124
      %p126 = scmp.ne.s32.totalorder %s115, %s116
      %p127 = scmp.eq.s32.totalorder %s21, 0
      %p128 = por %p126, %p127
      %p129 = scmp.ne.s32.totalorder %s115, %s116
      %p130 = scmp.eq.s32.totalorder %s22, 2
      %p131 = por %p129, %p130
      %p133 = scmp.ne.s32.totalorder %s116, %s132
      %p134 = scmp.eq.s32.totalorder %s22, 0
      %p135 = por %p133, %p134
      %s136 = ssub.s32 %s23, %s49
      %s137 = ssub.s32 %s24, %s45
      %s138 = sor.u32 %s136, %s137
      %s139 = ssub.s32 %s25, %s41
      %s140 = sor.u32 %s138, %s139
      %p141 = scmp.eq.s32.totalorder %s140, 0
      %s143 = sadd.s32 %s142, 1
      %s144 = scalar_select %p141, %s142, %s143
      %p147 = pneg %p141
      %p148 = scmp.eq.s32.totalorder %s16, 2
      %p149 = por %p147, %p148
      %p150 = scmp.ne.s32.totalorder %s142, %s145
      %p151 = scmp.eq.s32.totalorder %s16, 0
      %p152 = por %p150, %p151
      %p153 = scmp.ne.s32.totalorder %s142, %s145
      %p154 = scmp.eq.s32.totalorder %s21, 2
      %p155 = por %p153, %p154
      %p156 = scmp.ne.s32.totalorder %s145, %s146
      %p157 = scmp.eq.s32.totalorder %s21, 0
      %p158 = por %p156, %p157
      %p159 = scmp.ne.s32.totalorder %s145, %s146
      %p160 = scmp.eq.s32.totalorder %s22, 2
      %p161 = por %p159, %p160
      %p163 = scmp.ne.s32.totalorder %s146, %s162
      %p164 = scmp.eq.s32.totalorder %s22, 0
      %p165 = por %p163, %p164
      %p166 = scmp.le.s32.totalorder 1, %s16
      %p167 = scmp.lt.s32.totalorder %s16, 4
      %p168 = pnand %p166, %p167
      %p169 = pneg %p168
      // Predicated region
      $region9: #{tpu_custom_call.1} parent=5 // pred_check
        _
      $region10: #{tpu_custom_call.1} parent=5 // pred_check_branch
        %171 = sbr.rel (%p168) target = $region12
      $region11: #{tpu_custom_call.1} parent=5 // pred_region
        %s172 = ssub.s32 %s16, 1
        // Predicated region
        $region13: #{tpu_custom_call.1} parent=11 // pred_check
          %p173 = pneg %p70
        $region14: #{tpu_custom_call.1} parent=11 // pred_check_branch
          %175 = sbr.rel (%p173) target = $region16
        $region15: #{tpu_custom_call.1} parent=11 // pred_region
          %s176 = smul.u32 2, %s28
          %s178 = ssub.s32 128, 128
          %179 = vsyncadd [#allocation4], %s178
          %s180 = sadd.s32 %s30, %s176
          %s181 = smul.addr %s180, 64
          %s182 = scalar_lea.hbm %s0, %s181
          %s183 = sshll.u32 [#allocation3], 4
          %s184 = int_to_ptr.vmem [resolvable:$true] %s183
          %189 = dma.hbm_to_vmem [thread:$0]  %s182, 128, %s184, [#allocation4], 64, 64, 4
        $region16: #{tpu_custom_call.1} parent=11 // pred_fallthru
          _
      $region12: #{tpu_custom_call.1} parent=5 // pred_fallthru
        _
      %p190 = scmp.lt.s32.totalorder %s16, 3
      // Predicated region
      $region17: #{tpu_custom_call.1} parent=5 // pred_check
        %p191 = pneg %p190
      $region18: #{tpu_custom_call.1} parent=5 // pred_check_branch
        %193 = sbr.rel (%p191) target = $region20
      $region19: #{tpu_custom_call.1} parent=5 // pred_region
        // Predicated region
        $region21: #{tpu_custom_call.1} parent=19 // pred_check
          %p194 = pneg %p94
        $region22: #{tpu_custom_call.1} parent=19 // pred_check_branch
          %196 = sbr.rel (%p194) target = $region24
        $region23: #{tpu_custom_call.1} parent=19 // pred_region
          %s197 = sand.u32 %s84, 1
          %s198 = scalar_lea.sflag [#allocation7], %s197
          %s199 = sand.u32 %s84, 1
          %s200 = smul.addr %s199, 16
          %s201 = scalar_lea.vmem [#allocation6], %s200
          %s202 = smul.u32 4, %s26
          %s204 = ssub.s32 256, 256
          %205 = vsyncadd %s198, %s204
          %s206 = sadd.s32 %s25, %s202
          %s207 = smul.addr %s23, 4
          %s208 = sadd.s32 %s206, %s207
          %s209 = smul.addr %s208, 64
          %s210 = scalar_lea.hbm %s1, %s209
          %s211 = sshll.u32 %s201, 4
          %s212 = int_to_ptr.vmem [resolvable:$true] %s211
          %217 = dma.hbm_to_vmem [thread:$0]  %s210, 256, %s212, %s198, 64, 64, 4
        $region24: #{tpu_custom_call.1} parent=19 // pred_fallthru
          _
        // Predicated region
        $region25: #{tpu_custom_call.1} parent=19 // pred_check
          %p218 = pneg %p122
        $region26: #{tpu_custom_call.1} parent=19 // pred_check_branch
          %220 = sbr.rel (%p218) target = $region28
        $region27: #{tpu_custom_call.1} parent=19 // pred_region
          %p221 = scmp.lt.s32.totalorder %s23, 2
          %s222 = scalar_select %p221, %s23, 2
          %p223 = scmp.lt.s32.totalorder %s25, 0
          %s224 = scalar_select %p223, %s25, 0
          %s225 = sadd.s32 %s224, %s222
          %s226 = scalar_lea.vmem %s2, %s225
        $region28: #{tpu_custom_call.1} parent=19 // pred_fallthru
          _
      $region20: #{tpu_custom_call.1} parent=5 // pred_fallthru
        _
      %p227 = scmp.le.s32.totalorder 1, %s16
      %p228 = scmp.lt.s32.totalorder %s16, 4
      %p229 = pnand %p227, %p228
      %p230 = pneg %p229
      // Predicated region
      $region29: #{tpu_custom_call.1} parent=5 // pred_check
        _
      $region30: #{tpu_custom_call.1} parent=5 // pred_check_branch
        %232 = sbr.rel (%p229) target = $region32
      $region31: #{tpu_custom_call.1} parent=5 // pred_region
        %s233 = ssub.s32 %s16, 1
        // Predicated region
        $region33: #{tpu_custom_call.1} parent=31 // pred_check
          %p234 = pneg %p70
        $region34: #{tpu_custom_call.1} parent=31 // pred_check_branch
          %236 = sbr.rel (%p234) target = $region36
        $region35: #{tpu_custom_call.1} parent=31 // pred_region
          %237 = dma.done [#allocation4], 128
        $region36: #{tpu_custom_call.1} parent=31 // pred_fallthru
          _
        %s238 = sand.u32 %s87, 1
        %s239 = scalar_lea.sflag [#allocation7], %s238
        %s240 = sand.u32 %s87, 1
        %s241 = smul.addr %s240, 16
        %s242 = scalar_lea.vmem [#allocation6], %s241
        // Predicated region
        $region37: #{tpu_custom_call.1} parent=31 // pred_check
          %p243 = pneg %p100
        $region38: #{tpu_custom_call.1} parent=31 // pred_check_branch
          %245 = sbr.rel (%p243) target = $region40
        $region39: #{tpu_custom_call.1} parent=31 // pred_region
          %246 = dma.done %s239, 256
        $region40: #{tpu_custom_call.1} parent=31 // pred_fallthru
          _
        %p247 = pneg %p70
        %p248 = pneg %p67
        %s249 = sand.u32 %s87, 1
        %s250 = scalar_lea.sflag [#allocation7], %s249
        %s251 = sand.u32 %s87, 1
        %s252 = smul.addr %s251, 16
        %s253 = scalar_lea.vmem [#allocation6], %s252
        %p254 = pneg %p100
        %p255 = pneg %p97
        %p256 = scmp.lt.s32.totalorder %s27, 2
        %s257 = scalar_select %p256, %s27, 2
        %p258 = scmp.lt.s32.totalorder %s29, 0
        %s259 = scalar_select %p258, %s29, 0
        %s260 = sadd.s32 %s259, %s257
        %s261 = scalar_lea.vmem %s2, %s260
        %p262 = pneg %p128
        %p263 = pneg %p125
        %p264 = pneg %p158
        %p265 = pneg %p155
        %s266 = sand.u32 %s145, 1
        %s267 = scalar_lea.sflag [#allocation5], %s266
        %s268 = sand.u32 %s145, 1
        %s269 = smul.addr %s268, 8
        %s270 = scalar_lea.vmem [#allocation8], %s269
        %s271 = smul.u32 2, %s28
        %s272 = smul.u32 4, %s30
        %p273 = scmp.lt.s32.totalorder %s27, 2
        %s274 = scalar_select %p273, %s27, 2
        %p275 = scmp.lt.s32.totalorder %s29, 0
        %s276 = scalar_select %p275, %s29, 0
        %s277 = sadd.s32 %s276, %s274
        %s278 = scalar_lea.vmem %s2, %s277
        %s279 = smul.u32 2, %s28
        %p281 = scmp.eq.s32.totalorder %s30, 0
        // Predicated region
        $region41: #{tpu_custom_call.1} parent=31 // pred_check
          %p282 = pneg %p281
        $region42: #{tpu_custom_call.1} parent=31 // pred_check_branch
          %284 = sbr.rel (%p282) target = $region44
        $region43: #{tpu_custom_call.1} parent=31 // pred_region
          %vm285 = vcmask 261120
          %286 = vst.msk [vmem:[#allocation2] sm:$0xff] %vm285, 0.0
          %287 = vst.msk [vmem:[#allocation2 + $0x8] sm:$0xff] %vm285, 0.0
        $region44: #{tpu_custom_call.1} parent=31 // pred_fallthru
          _
        %v288 = vld [vmem:[#allocation2] sm:$0xff]
        %v289 = vld [vmem:[#allocation2 + $0x8] sm:$0xff]
        %v290 = vld [vmem:[#allocation3] sm:$0xf]
        %v291 = vld [vmem:[#allocation3 + $0x4] sm:$0xf]
        %v292 = vld [vmem:[%s242] sm:$0xf]
        %v293 = vld [vmem:[%s242 + $0x4] sm:$0xf]
        %v294 = vld [vmem:[%s242 + $0x8] sm:$0xf]
        %v295 = vld [vmem:[%s242 + $0xc] sm:$0xf]
        %v298 = vunpack.c.l.b16 %v290
        %v299 = vunpack.c.l.b16 %v291
        %v300 = vpack.c.b16 %v299, %v298
        %v305 = vunpack.c.l.b16 %v292
        %v306 = vunpack.c.l.b16 %v293
        %v307 = vunpack.c.l.b16 %v294
        %v308 = vunpack.c.l.b16 %v295
        %v309 = vpack.c.b16 %v306, %v305
        %v310 = vpack.c.b16 %v308, %v307
        %vm313 = vcmask 261120
        %v315 = vsel %vm313, %v300, 0
        %317 = vmatprep.subr.bf16.mxu0 0
        %318 = vmatpush1.bf16.msra.mxu0 0
        %319 = vmatprep.subr.bf16.mxu0 0
        %320 = vmatpush1.bf16.msra.mxu0 0
        %321 = vmatprep.subr.bf16.mxu0 0
        %322 = vmatpush1.bf16.msra.mxu0 0
        %323 = vmatprep.subr.bf16.mxu0 0
        %324 = vmatpush1.bf16.msra.mxu0 0
        %325 = vmatprep.subr.bf16.mxu0 0
        %326 = vmatpush1.bf16.msra.mxu0 0
        %327 = vmatprep.subr.bf16.mxu0 0
        %328 = vmatpush1.bf16.msra.mxu0 0
        %329 = vmatprep.subr.bf16.mxu0 0
        %330 = vmatpush1.bf16.msra.mxu0 %v310
        %331 = vmatprep.subr.bf16.mxu0 0
        %332 = vmatpush1.bf16.msra.mxu0 %v309
        %333 = vmatprep.subr.bf16.mxu0 0
        %334 = vmatpush2.bf16.msra.mxu0 0
        %335 = vmatprep.subr.bf16.mxu0 0
        %336 = vmatpush2.bf16.msra.mxu0 0
        %337 = vmatprep.subr.bf16.mxu0 0
        %338 = vmatpush2.bf16.msra.mxu0 0
        %339 = vmatprep.subr.bf16.mxu0 0
        %340 = vmatpush2.bf16.msra.mxu0 0
        %341 = vmatprep.subr.bf16.mxu0 0
        %342 = vmatpush2.bf16.msra.mxu0 0
        %343 = vmatprep.subr.bf16.mxu0 0
        %344 = vmatpush2.bf16.msra.mxu0 0
        %345 = vmatprep.subr.bf16.mxu0 0
        %346 = vmatpush2.bf16.msra.mxu0 0
        %347 = vmatprep.subr.bf16.mxu0 0
        %348 = vmatpush2.bf16.msra.mxu0 0
        %349 = vmatprep.mubr.bf16.mxu0 0
        %350 = vmatmul.mubr.bf16.gmra.mxu0 %v315
        %v351 = vpop.f32.mrf.mxu0
        %v352 = vadd.f32 0.0, %v351
        %v353 = vpop.f32.mrf.mxu0
        %v354 = vpop.f32.mrf.mxu0
        %v355 = vadd.f32 0.0, %v354
        %v356 = vpop.f32.mrf.mxu0
        %357 = vdwg.mxu0
        %v358 = vadd.f32 %v288, %v352
        %v359 = vadd.f32 %v289, %v355
        %360 = vst.msk [vmem:[#allocation2] sm:$0xff] %vm313, %v358
        %361 = vst.msk [vmem:[#allocation2 + $0x8] sm:$0xff] %vm313, %v359
        // Predicated region
        $region45: #{tpu_custom_call.1} parent=31 // pred_check
          %p362 = pneg %p281
        $region46: #{tpu_custom_call.1} parent=31 // pred_check_branch
          %364 = sbr.rel (%p362) target = $region48
        $region47: #{tpu_custom_call.1} parent=31 // pred_region
          %v365 = vld [vmem:[#allocation2] sm:$0xff]
          %v366 = vld [vmem:[#allocation2 + $0x8] sm:$0xff]
          %v367 = vld [vmem:[%s278] sm:$0x1]
          %v368 = vunpack.c.l.bf16 %v367
          %v369 = vlaneseq
          %v370 = vshrl.u32 %v369, 7
          %v371 = vsub.s32 0, %v370
          %v372 = vrot.slane %v368, %v371
          %v373 = vadd.f32 %v365, %v372
          %v374 = vadd.f32 %v366, %v372
          %v375 = vpack.c.bf16 %v374, %v373
          %v377 = vunpack.c.l.b16 %v375
          %v378 = vunpack.c.h.b16 %v375
          %v379 = vpack.c.b16 %v377, %v377
          %v380 = vpack.c.b16 %v378, %v378
          %vm383 = vcmask 257024
          %384 = vst.msk [vmem:[%s270] sm:$0xf] %vm383, %v379
          %385 = vst.msk [vmem:[%s270 + $0x4] sm:$0xf] %vm383, %v380
        $region48: #{tpu_custom_call.1} parent=31 // pred_fallthru
          _
        %s386 = sand.u32 %s145, 1
        %s387 = scalar_lea.sflag [#allocation5], %s386
        %s388 = sand.u32 %s145, 1
        %s389 = smul.addr %s388, 8
        %s390 = scalar_lea.vmem [#allocation8], %s389
        // Predicated region
        $region49: #{tpu_custom_call.1} parent=31 // pred_check
          %p391 = pneg %p155
        $region50: #{tpu_custom_call.1} parent=31 // pred_check_branch
          %393 = sbr.rel (%p391) target = $region52
        $region51: #{tpu_custom_call.1} parent=31 // pred_region
          %s394 = smul.u32 2, %s28
          %s396 = ssub.s32 128, 128
          %397 = vsyncadd %s387, %s396
          %s398 = sadd.s32 %s29, %s394
          %s399 = smul.addr %s27, 2
          %s400 = sadd.s32 %s398, %s399
          %s401 = smul.addr %s400, 64
          %s402 = scalar_lea.hbm %s3, %s401
          %s403 = sshll.u32 %s390, 4
          %s404 = int_to_ptr.vmem [resolvable:$true] %s403
          %409 = dma.vmem_to_hbm [thread:$0]  %s404, 128, %s402, %s387, 64, 64, 4
        $region52: #{tpu_custom_call.1} parent=31 // pred_fallthru
          _
      $region32: #{tpu_custom_call.1} parent=5 // pred_fallthru
        _
      %p410 = scmp.le.s32.totalorder 2, %s16
      // Predicated region
      $region53: #{tpu_custom_call.1} parent=5 // pred_check
        %p411 = pneg %p410
      $region54: #{tpu_custom_call.1} parent=5 // pred_check_branch
        %413 = sbr.rel (%p411) target = $region56
      $region55: #{tpu_custom_call.1} parent=5 // pred_region
        %s414 = ssub.s32 %s16, 2
        // Predicated region
        $region57: #{tpu_custom_call.1} parent=55 // pred_check
          %p415 = pneg %p161
        $region58: #{tpu_custom_call.1} parent=55 // pred_check_branch
          %417 = sbr.rel (%p415) target = $region60
        $region59: #{tpu_custom_call.1} parent=55 // pred_region
          %s418 = sand.u32 %s146, 1
          %s419 = scalar_lea.sflag [#allocation5], %s418
          %s420 = sand.u32 %s146, 1
          %s421 = smul.addr %s420, 8
          %s422 = scalar_lea.vmem [#allocation8], %s421
          %423 = dma.done %s419, 128
        $region60: #{tpu_custom_call.1} parent=55 // pred_fallthru
          _
      $region56: #{tpu_custom_call.1} parent=5 // pred_fallthru
        _
    $region6: #{tpu_custom_call.1} parent=1 // loop_footer
      %s20 = sadd.s32 1, %s16
    $region7: #{tpu_custom_call.1} parent=1 // loop_footer_branch
      %15 = sbr.rel target = $region3
    $region8: #{tpu_custom_call.1} parent=1 // loop_exit
      _
    %424 = vsyncpa [#allocation4], 1
    %s425 = scalar_lea.sflag [#allocation4], 1
    %426 = vsyncpa %s425, 1
    %427 = vsyncpa [#allocation7], 1
    %s428 = scalar_lea.sflag [#allocation7], 1
    %429 = vsyncpa %s428, 1
    %430 = vsyncpa [#allocation5], 1
    %s431 = scalar_lea.sflag [#allocation5], 1
    %432 = vsyncpa %s431, 1

</llo_original>
